<compile_context>
chip_gen: v6e
topology: v6e:2x2x1
jax: 0.10.0
libtpu: 0.0.40
codegen_flags: <defaults>
</compile_context>

<pallas_src>
import functools

import jax
import jax.numpy as jnp
from jax.experimental import pallas as pl
from jax.experimental.pallas import tpu as pltpu


# ----------------------------- Pallas kernel ------------------------------ #
def amd_kernel(v_actual, dec_in_ref, mem_in_ref, wdec_ref, wmem_ref,
               bias_ref, wout_ref, out_ref):
    f32 = jnp.float32

    # Fused decoder-side projection: (B, Din) @ (Din, K) -> (B, K), + summed bias.
    dec = jnp.dot(dec_in_ref[...], wdec_ref[...], preferred_element_type=f32)
    dec = dec + bias_ref[...]                               # bias: (1, K)

    # Fused memory-side projection, vocab on lanes:
    #   (K, 2*topk) @ (2*topk, Vp) -> (K, Vp)
    mem = jnp.dot(wmem_ref[...], mem_in_ref[...], preferred_element_type=f32)

    # Broadcast-add and tanh with V (=128 lanes) dense on the lane axis.
    pre = dec[:, :, None] + mem[None, :, :]                 # (B, K, Vp)
    act = jnp.tanh(pre)

    # Output Linear(K, 1): wout-weighted reduce over K (sublane axis);
    # V stays on lanes.  (bout omitted: softmax-invariant.)
    scores = jnp.sum(act * wout_ref[...][None, :, :], axis=1)   # (B, Vp)

    # Mask padded vocab columns, then softmax over the vocab (lane) axis.
    col = jax.lax.broadcasted_iota(jnp.int32, scores.shape, 1)
    scores = jnp.where(col < v_actual, scores, -jnp.inf)

    m = jnp.max(scores, axis=1, keepdims=True)
    e = jnp.exp(scores - m)
    inv = pl.reciprocal(jnp.sum(e, axis=1, keepdims=True), approx=False)
    out_ref[...] = e * inv


# ------------------------------ wrapper ----------------------------------- #
def attended_memory_decoder(ct, et, ht, gi, ei, params):
    """ct/et/ht: (1, B, *) PyTorch-style; gi/ei: (V, topk)."""
    ct2, et2, ht2 = ct[0], et[0], ht[0]                     # (B, feat)
    B = ht2.shape[0]
    V = gi.shape[0]

    (wdv, bdv, wde, bde, wdh, bdh, wmv, bmv, wme, bme, wout, bout) = params
    del bout  # adding a scalar to every logit is a softmax no-op
    K = wdv.shape[0]

    LANES = 128
    Vp = ((V + LANES - 1) // LANES) * LANES                 # lane-dense vocab pad

    # Fuse the 3 decoder-side matmuls: concat inputs + pre-transposed weights.
    dec_in = jnp.concatenate([ct2, et2, ht2], axis=1).astype(jnp.float32)   # (B, Din)
    wdec = jnp.concatenate([wdv, wde, wdh], axis=1).T.astype(jnp.float32)   # (Din, K)

    # Fuse the 2 memory-side matmuls; vocab moves to the last (lane) axis.
    mem_in = jnp.concatenate([gi, ei], axis=1).astype(jnp.float32)          # (V, 2*topk)
    mem_in_t = jnp.zeros((mem_in.shape[1], Vp), jnp.float32)
    mem_in_t = mem_in_t.at[:, :V].set(mem_in.T)                             # (2*topk, Vp)
    wmem = jnp.concatenate([wmv, wme], axis=1).astype(jnp.float32)          # (K, 2*topk)

    # All five projection biases collapse into one (1, K) vector.
    bias_sum = (bdv + bde + bdh + bmv + bme).reshape(1, K).astype(jnp.float32)

    # Output Linear(K, 1) weight, column layout for the K-sublane reduce.
    wout_col = wout.reshape(K, 1).astype(jnp.float32)

    vmem = pl.BlockSpec(memory_space=pltpu.MemorySpace.VMEM)
    out_padded = pl.pallas_call(
        functools.partial(amd_kernel, V),
        out_shape=jax.ShapeDtypeStruct((B, Vp), jnp.float32),
        in_specs=[vmem] * 6,
        out_specs=vmem,
    )(dec_in, mem_in_t, wdec, wmem, bias_sum, wout_col)

    return out_padded[:, :V]


# -------------------------- pure-JAX reference ----------------------------- #
def reference(ct, et, ht, gi, ei, params):
    (wdv, bdv, wde, bde, wdh, bdh, wmv, bmv, wme, bme, wout, bout) = params
    mem_we = ei @ wme.T + bme                                  # (V, K)
    mem_vis = gi @ wmv.T + bmv                                 # (V, K)
    dec_vis = (ct[0] @ wdv.T + bdv)[:, None, :]                # (B, 1, K)
    dec_we = (et[0] @ wde.T + bde)[:, None, :]
    dec_hid = (ht[0] @ wdh.T + bdh)[:, None, :]
    out = jnp.tanh(dec_vis + mem_vis[None] + dec_we + mem_we[None] + dec_hid)
    scores = jnp.einsum("bvk,k->bv", out, wout) + bout[0]
    return jax.nn.softmax(scores, axis=1)


# ------------------------------ setup -------------------------------------- #
def make_linear(key, out_f, in_f):
    kw, kb = jax.random.split(key)
    bound = 1.0 / (in_f ** 0.5)
    w = jax.random.uniform(kw, (out_f, in_f), jnp.float32, -bound, bound)
    b = jax.random.uniform(kb, (out_f,), jnp.float32, -bound, bound)
    return w, b


if __name__ == "__main__":
    # cfg: feat_size=8 (so 2*feat_size=16), embedding_size=16,
    # decoder_hidden_size=32, amd_bottleneck_size=32, topk=8, vocab=16
    B, FEAT2, EMB, HID, K, TOPK, V = 2, 16, 16, 32, 32, 8, 16

    root = jax.random.PRNGKey(0)
    keys = jax.random.split(root, 12)

    wdv, bdv = make_linear(keys[0], K, FEAT2)   # decoder_visual_context_projection
    wde, bde = make_linear(keys[1], K, EMB)     # decoder_word_embed_projection
    wdh, bdh = make_linear(keys[2], K, HID)     # decoder_hidden_projection
    wmv, bmv = make_linear(keys[3], K, TOPK)    # memory_visual_context_projection
    wme, bme = make_linear(keys[4], K, TOPK)    # memory_word_embed_projection
    wout_, bout_ = make_linear(keys[5], 1, K)   # output
    wout = wout_[0]                             # (K,)
    params = (wdv, bdv, wde, bde, wdh, bdh, wmv, bmv, wme, bme, wout, bout_)

    # Decoder-side inputs, PyTorch-style (1, B, feat)
    ct = jax.random.normal(keys[6], (1, B, FEAT2), jnp.float32)
    et = jax.random.normal(keys[7], (1, B, EMB), jnp.float32)
    ht = jax.random.normal(keys[8], (1, B, HID), jnp.float32)

    # Memory representation: first 4 vocab entries are zeros (special tokens),
    # remaining rows come from the memory dict (synthesized here).
    # TODO(synk): the voc/memory dict lookup of _create_memory_representation is
    # host-side glue; we synthesize the stacked (V, topk) tensors directly.
    ei_rest = jax.random.normal(keys[9], (V - 4, TOPK), jnp.float32)
    gi_rest = jax.random.normal(keys[10], (V - 4, TOPK), jnp.float32)
    ei = jnp.concatenate([jnp.zeros((4, TOPK), jnp.float32), ei_rest], axis=0)
    gi = jnp.concatenate([jnp.zeros((4, TOPK), jnp.float32), gi_rest], axis=0)

    out = attended_memory_decoder(ct, et, ht, gi, ei, params)
    out = jax.block_until_ready(out)

    ref = reference(ct, et, ht, gi, ei, params)
    assert out.shape == (B, V)
    assert jnp.allclose(out, ref, atol=1e-5, rtol=1e-5), (out, ref)

    print("KERNEL_OK")
</pallas_src>

<mosaic_0001>
module attributes {stable_mosaic.version = 11 : i64} {
  func.func @amd_kernel(%arg0: memref<2x64xf32, #tpu.memory_space<vmem>>, %arg1: memref<16x128xf32, #tpu.memory_space<vmem>>, %arg2: memref<64x32xf32, #tpu.memory_space<vmem>>, %arg3: memref<32x16xf32, #tpu.memory_space<vmem>>, %arg4: memref<1x32xf32, #tpu.memory_space<vmem>>, %arg5: memref<32x1xf32, #tpu.memory_space<vmem>>, %arg6: memref<2x128xf32, #tpu.memory_space<vmem>>) attributes {dimension_semantics = [], scalar_prefetch = 0 : i64, scratch_operands = 0 : i64, tpu.core_type = #tpu.core_type<tc>} {
    %c0 = arith.constant 0 : index
    %c0_0 = arith.constant 0 : index
    %0 = vector.load %arg0[%c0, %c0_0] : memref<2x64xf32, #tpu.memory_space<vmem>>, vector<2x64xf32>
    %c0_1 = arith.constant 0 : index
    %c0_2 = arith.constant 0 : index
    %1 = vector.load %arg2[%c0_1, %c0_2] : memref<64x32xf32, #tpu.memory_space<vmem>>, vector<64x32xf32>
    %cst = arith.constant dense<0.000000e+00> : vector<2x32xf32>
    %2 = tpu.matmul %0, %1, %cst {dimension_numbers = #tpu.dot_dimension_numbers<[1], [0], [0], [1], [0, 0, 1, 1], [], []>} : vector<2x64xf32>, vector<64x32xf32>, vector<2x32xf32> -> vector<2x32xf32>
    %c0_3 = arith.constant 0 : index
    %c0_4 = arith.constant 0 : index
    %3 = vector.load %arg4[%c0_3, %c0_4] : memref<1x32xf32, #tpu.memory_space<vmem>>, vector<1x32xf32>
    %4 = vector.broadcast %3 : vector<1x32xf32> to vector<2x32xf32>
    %5 = arith.addf %2, %4 : vector<2x32xf32>
    %c0_5 = arith.constant 0 : index
    %c0_6 = arith.constant 0 : index
    %6 = vector.load %arg3[%c0_5, %c0_6] : memref<32x16xf32, #tpu.memory_space<vmem>>, vector<32x16xf32>
    %c0_7 = arith.constant 0 : index
    %c0_8 = arith.constant 0 : index
    %7 = vector.load %arg1[%c0_7, %c0_8] : memref<16x128xf32, #tpu.memory_space<vmem>>, vector<16x128xf32>
    %cst_9 = arith.constant dense<0.000000e+00> : vector<32x128xf32>
    %8 = tpu.matmul %6, %7, %cst_9 {dimension_numbers = #tpu.dot_dimension_numbers<[1], [0], [0], [1], [0, 0, 1, 1], [], []>} : vector<32x16xf32>, vector<16x128xf32>, vector<32x128xf32> -> vector<32x128xf32>
    %9 = vector.shape_cast %5 : vector<2x32xf32> to vector<2x32x1xf32>
    %10 = vector.shape_cast %8 : vector<32x128xf32> to vector<1x32x128xf32>
    %11 = vector.broadcast %9 : vector<2x32x1xf32> to vector<2x32x128xf32>
    %12 = vector.broadcast %10 : vector<1x32x128xf32> to vector<2x32x128xf32>
    %13 = arith.addf %11, %12 : vector<2x32x128xf32>
    %14 = math.tanh %13 : vector<2x32x128xf32>
    %c0_10 = arith.constant 0 : index
    %c0_11 = arith.constant 0 : index
    %15 = vector.load %arg5[%c0_10, %c0_11] : memref<32x1xf32, #tpu.memory_space<vmem>>, vector<32x1xf32>
    %16 = vector.shape_cast %15 : vector<32x1xf32> to vector<1x32x1xf32>
    %17 = vector.broadcast %16 : vector<1x32x1xf32> to vector<2x32x128xf32>
    %18 = arith.mulf %14, %17 : vector<2x32x128xf32>
    %cst_12 = arith.constant dense<0.000000e+00> : vector<2x128xf32>
    %19 = vector.multi_reduction <add>, %18, %cst_12 [1] : vector<2x32x128xf32> to vector<2x128xf32>
    %20 = tpu.iota {dimensions = array<i32: 1>} : vector<2x128xi32>
    %c16_i32 = arith.constant 16 : i32
    %21 = vector.broadcast %c16_i32 : i32 to vector<2x128xi32>
    %22 = arith.cmpi slt, %20, %21 : vector<2x128xi32>
    %cst_13 = arith.constant 0xFF800000 : f32
    %23 = vector.broadcast %cst_13 : f32 to vector<2x128xf32>
    %24 = arith.select %22, %19, %23 : vector<2x128xi1>, vector<2x128xf32>
    %cst_14 = arith.constant dense<0xFF800000> : vector<2xf32>
    %25 = vector.multi_reduction <maximumf>, %24, %cst_14 [1] : vector<2x128xf32> to vector<2xf32>
    %26 = vector.shape_cast %25 : vector<2xf32> to vector<2x1xf32>
    %27 = vector.broadcast %26 : vector<2x1xf32> to vector<2x128xf32>
    %28 = arith.subf %24, %27 : vector<2x128xf32>
    %29 = math.exp %28 : vector<2x128xf32>
    %cst_15 = arith.constant dense<0.000000e+00> : vector<2xf32>
    %30 = vector.multi_reduction <add>, %29, %cst_15 [1] : vector<2x128xf32> to vector<2xf32>
    %31 = vector.shape_cast %30 : vector<2xf32> to vector<2x1xf32>
    %32 = tpu.reciprocal %31 : vector<2x1xf32> -> vector<2x1xf32>
    %33 = vector.broadcast %32 : vector<2x1xf32> to vector<2x128xf32>
    %34 = arith.mulf %29, %33 : vector<2x128xf32>
    %c0_16 = arith.constant 0 : index
    %c0_17 = arith.constant 0 : index
    %35 = vector.load %arg6[%c0_16, %c0_17] : memref<2x128xf32, #tpu.memory_space<vmem>>, vector<2x128xf32>
    tpu.vector_store %arg6[%c0_16, %c0_17], %34 {strides = array<i32>} : memref<2x128xf32, #tpu.memory_space<vmem>>, vector<2x128xf32>,
    return
  }
}

</mosaic_0001>

<llo_original>
// kernel: tpu_custom_call.1
$region0: #{tpu_custom_call.1}
  #allocation0 [shape = 'u32[]', space=smem, size = 0x4, offset = 0x4, fixed_abs, tag = 'smem constant byte address 0x4 - core index']
  #allocation1 [shape = 'u32[144,128]{1,0:T(1,128)}', space=vmem, size = 0x12000, scoped, tag = 'internal scratch']
  %s0 = inlined_call_operand.vmem [shape: f32[2,64], index: 0, kind: input, shape index: {}]
  %s1 = inlined_call_operand.vmem [shape: f32[16,128], index: 1, kind: input, shape index: {}]
  %s2 = inlined_call_operand.vmem [shape: f32[64,32], index: 2, kind: input, shape index: {}]
  %s3 = inlined_call_operand.vmem [shape: f32[32,16], index: 3, kind: input, shape index: {}]
  %s4 = inlined_call_operand.vmem [shape: f32[1,32], index: 4, kind: input, shape index: {}]
  %s5 = inlined_call_operand.vmem [shape: f32[32,1], index: 5, kind: input, shape index: {}]
  %s6 = inlined_call_operand.hbm [shape: f32[2,128], index: 6, kind: output, shape index: {}]
  %s7 = sld [smem:[#allocation0]]
  $region34: #{tpu_custom_call.1} parent=0
    _
  %s9 = ssub.s32 1, %s7
  %s10 = scalar_select 0, %s9, %s7
  $region1: #{tpu_custom_call.1} parent=0
    #allocation2 [shape = 'u8[1024]{0}', space=vmem, size = 0x400, scoped, tag = 'output window, operand 0, single buffered']
    #allocation3 [shape = 's32[1]{0}', space=sflag, size = 0x4, scoped, tag = 'scoped memory for tpu_custom_call.1']
    %11 = vsyncpa [#allocation3], 0
    // Predicated region
    $region2: #{tpu_custom_call.1} parent=1 // pred_check
      _
    $region3: #{tpu_custom_call.1} parent=1 // pred_check_branch
      %13 = sbr.rel (0) target = $region5
    $region4: #{tpu_custom_call.1} parent=1 // pred_region
      _
    $region5: #{tpu_custom_call.1} parent=1 // pred_fallthru
      _
    // Predicated region
    $region6: #{tpu_custom_call.1} parent=1 // pred_check
      _
    $region7: #{tpu_custom_call.1} parent=1 // pred_check_branch
      %15 = sbr.rel (0) target = $region9
    $region8: #{tpu_custom_call.1} parent=1 // pred_region
      _
    $region9: #{tpu_custom_call.1} parent=1 // pred_fallthru
      _
    // Predicated region
    $region10: #{tpu_custom_call.1} parent=1 // pred_check
      _
    $region11: #{tpu_custom_call.1} parent=1 // pred_check_branch
      %17 = sbr.rel (0) target = $region13
    $region12: #{tpu_custom_call.1} parent=1 // pred_region
      _
    $region13: #{tpu_custom_call.1} parent=1 // pred_fallthru
      _
    // Predicated region
    $region14: #{tpu_custom_call.1} parent=1 // pred_check
      _
    $region15: #{tpu_custom_call.1} parent=1 // pred_check_branch
      %19 = sbr.rel (0) target = $region17
    $region16: #{tpu_custom_call.1} parent=1 // pred_region
      _
    $region17: #{tpu_custom_call.1} parent=1 // pred_fallthru
      _
    // Predicated region
    $region18: #{tpu_custom_call.1} parent=1 // pred_check
      _
    $region19: #{tpu_custom_call.1} parent=1 // pred_check_branch
      %21 = sbr.rel (0) target = $region21
    $region20: #{tpu_custom_call.1} parent=1 // pred_region
      _
    $region21: #{tpu_custom_call.1} parent=1 // pred_fallthru
      _
    // Predicated region
    $region22: #{tpu_custom_call.1} parent=1 // pred_check
      _
    $region23: #{tpu_custom_call.1} parent=1 // pred_check_branch
      %23 = sbr.rel (0) target = $region25
    $region24: #{tpu_custom_call.1} parent=1 // pred_region
      _
    $region25: #{tpu_custom_call.1} parent=1 // pred_fallthru
      _
    %v24 = vld [vmem:[%s0] sm:$0x3]
    %v25 = vld [vmem:[%s2] sm:$0xff]
    %v26 = vld [vmem:[%s2 + $0x8] sm:$0xff]
    %v27 = vld [vmem:[%s2 + $0x10] sm:$0xff]
    %v28 = vld [vmem:[%s2 + $0x18] sm:$0xff]
    %v29 = vld [vmem:[%s2 + $0x20] sm:$0xff]
    %v30 = vld [vmem:[%s2 + $0x28] sm:$0xff]
    %v31 = vld [vmem:[%s2 + $0x30] sm:$0xff]
    %v32 = vld [vmem:[%s2 + $0x38] sm:$0xff]
    %v33 = vld [vmem:[%s4] sm:$0x1]
    %v35 = vlaneseq
    %v36 = vshrl.u32 %v35, 7
    %v37 = vsub.s32 0, %v36
    %v38 = vrot.slane %v33, %v37
    %vm40 = vcmask 523264
    %v42 = vsel %vm40, %v24, 0
    %44 = vmatprep.subr.mxu0 0.0
    %45 = vmatpush1.msra.mxu0 0.0
    %46 = vmatprep.subr.mxu0 0.0
    %47 = vmatpush1.msra.mxu0 0.0
    %48 = vmatprep.subr.mxu0 0.0
    %49 = vmatpush1.msra.mxu0 0.0
    %50 = vmatprep.subr.mxu0 0.0
    %51 = vmatpush1.msra.mxu0 0.0
    %52 = vmatprep.subr.mxu0 0.0
    %53 = vmatpush1.msra.mxu0 0.0
    %54 = vmatprep.subr.mxu0 0.0
    %55 = vmatpush1.msra.mxu0 0.0
    %56 = vmatprep.subr.mxu0 0.0
    %57 = vmatpush1.msra.mxu0 0.0
    %58 = vmatprep.subr.mxu0 0.0
    %59 = vmatpush1.msra.mxu0 0.0
    %60 = vmatprep.subr.mxu0 0.0
    %61 = vmatpush1.msra.mxu0 %v32
    %62 = vmatprep.subr.mxu0 0.0
    %63 = vmatpush1.msra.mxu0 %v31
    %64 = vmatprep.subr.mxu0 0.0
    %65 = vmatpush1.msra.mxu0 %v30
    %66 = vmatprep.subr.mxu0 0.0
    %67 = vmatpush1.msra.mxu0 %v29
    %68 = vmatprep.subr.mxu0 0.0
    %69 = vmatpush1.msra.mxu0 %v28
    %70 = vmatprep.subr.mxu0 0.0
    %71 = vmatpush1.msra.mxu0 %v27
    %72 = vmatprep.subr.mxu0 0.0
    %73 = vmatpush1.msra.mxu0 %v26
    %74 = vmatprep.subr.mxu0 0.0
    %75 = vmatpush1.msra.mxu0 %v25
    %76 = vmatprep.subr.mxu0 0.0
    %77 = vmatpush2.msra.mxu0 0.0
    %78 = vmatprep.subr.mxu0 0.0
    %79 = vmatpush2.msra.mxu0 0.0
    %80 = vmatprep.subr.mxu0 0.0
    %81 = vmatpush2.msra.mxu0 0.0
    %82 = vmatprep.subr.mxu0 0.0
    %83 = vmatpush2.msra.mxu0 0.0
    %84 = vmatprep.subr.mxu0 0.0
    %85 = vmatpush2.msra.mxu0 0.0
    %86 = vmatprep.subr.mxu0 0.0
    %87 = vmatpush2.msra.mxu0 0.0
    %88 = vmatprep.subr.mxu0 0.0
    %89 = vmatpush2.msra.mxu0 0.0
    %90 = vmatprep.subr.mxu0 0.0
    %91 = vmatpush2.msra.mxu0 0.0
    %92 = vmatprep.subr.mxu0 0.0
    %93 = vmatpush2.msra.mxu0 0.0
    %94 = vmatprep.subr.mxu0 0.0
    %95 = vmatpush2.msra.mxu0 0.0
    %96 = vmatprep.subr.mxu0 0.0
    %97 = vmatpush2.msra.mxu0 0.0
    %98 = vmatprep.subr.mxu0 0.0
    %99 = vmatpush2.msra.mxu0 0.0
    %100 = vmatprep.subr.mxu0 0.0
    %101 = vmatpush2.msra.mxu0 0.0
    %102 = vmatprep.subr.mxu0 0.0
    %103 = vmatpush2.msra.mxu0 0.0
    %104 = vmatprep.subr.mxu0 0.0
    %105 = vmatpush2.msra.mxu0 0.0
    %106 = vmatprep.subr.mxu0 0.0
    %107 = vmatpush2.msra.mxu0 0.0
    %108 = vmatprep.mubr.f32.mxu0 0.0
    %109 = vmatmul.mubr.f32.gmra.mxu0 %v42
    %v110 = vpop.f32.mrf.mxu0
    %v111 = vadd.f32 %v38, %v110
    %v112 = vpop.f32.mrf.mxu0
    %113 = vdwg.mxu0
    %v114 = vld [vmem:[%s3] sm:$0xff]
    %v115 = vld [vmem:[%s3 + $0x8] sm:$0xff]
    %v116 = vld [vmem:[%s3 + $0x10] sm:$0xff]
    %v117 = vld [vmem:[%s3 + $0x18] sm:$0xff]
    %v118 = vld [vmem:[%s1] sm:$0xff]
    %v119 = vld [vmem:[%s1 + $0x8] sm:$0xff]
    %vm120 = vcmask 130048
    %v122 = vsel %vm120, %v114, 0
    %v125 = vsel %vm120, %v115, 0
    %v128 = vsel %vm120, %v116, 0
    %v131 = vsel %vm120, %v117, 0
    %133 = vmatprep.subr.mxu0 0.0
    %134 = vmatpush1.msra.mxu0 0.0
    %135 = vmatprep.subr.mxu0 0.0
    %136 = vmatpush1.msra.mxu0 0.0
    %137 = vmatprep.subr.mxu0 0.0
    %138 = vmatpush1.msra.mxu0 0.0
    %139 = vmatprep.subr.mxu0 0.0
    %140 = vmatpush1.msra.mxu0 0.0
    %141 = vmatprep.subr.mxu0 0.0
    %142 = vmatpush1.msra.mxu0 0.0
    %143 = vmatprep.subr.mxu0 0.0
    %144 = vmatpush1.msra.mxu0 0.0
    %145 = vmatprep.subr.mxu0 0.0
    %146 = vmatpush1.msra.mxu0 0.0
    %147 = vmatprep.subr.mxu0 0.0
    %148 = vmatpush1.msra.mxu0 0.0
    %149 = vmatprep.subr.mxu0 0.0
    %150 = vmatpush1.msra.mxu0 0.0
    %151 = vmatprep.subr.mxu0 0.0
    %152 = vmatpush1.msra.mxu0 0.0
    %153 = vmatprep.subr.mxu0 0.0
    %154 = vmatpush1.msra.mxu0 0.0
    %155 = vmatprep.subr.mxu0 0.0
    %156 = vmatpush1.msra.mxu0 0.0
    %157 = vmatprep.subr.mxu0 0.0
    %158 = vmatpush1.msra.mxu0 0.0
    %159 = vmatprep.subr.mxu0 0.0
    %160 = vmatpush1.msra.mxu0 0.0
    %161 = vmatprep.subr.mxu0 0.0
    %162 = vmatpush1.msra.mxu0 %v119
    %163 = vmatprep.subr.mxu0 0.0
    %164 = vmatpush1.msra.mxu0 %v118
    %165 = vmatprep.subr.mxu0 0.0
    %166 = vmatpush2.msra.mxu0 0.0
    %167 = vmatprep.subr.mxu0 0.0
    %168 = vmatpush2.msra.mxu0 0.0
    %169 = vmatprep.subr.mxu0 0.0
    %170 = vmatpush2.msra.mxu0 0.0
    %171 = vmatprep.subr.mxu0 0.0
    %172 = vmatpush2.msra.mxu0 0.0
    %173 = vmatprep.subr.mxu0 0.0
    %174 = vmatpush2.msra.mxu0 0.0
    %175 = vmatprep.subr.mxu0 0.0
    %176 = vmatpush2.msra.mxu0 0.0
    %177 = vmatprep.subr.mxu0 0.0
    %178 = vmatpush2.msra.mxu0 0.0
    %179 = vmatprep.subr.mxu0 0.0
    %180 = vmatpush2.msra.mxu0 0.0
    %181 = vmatprep.subr.mxu0 0.0
    %182 = vmatpush2.msra.mxu0 0.0
    %183 = vmatprep.subr.mxu0 0.0
    %184 = vmatpush2.msra.mxu0 0.0
    %185 = vmatprep.subr.mxu0 0.0
    %186 = vmatpush2.msra.mxu0 0.0
    %187 = vmatprep.subr.mxu0 0.0
    %188 = vmatpush2.msra.mxu0 0.0
    %189 = vmatprep.subr.mxu0 0.0
    %190 = vmatpush2.msra.mxu0 0.0
    %191 = vmatprep.subr.mxu0 0.0
    %192 = vmatpush2.msra.mxu0 0.0
    %193 = vmatprep.subr.mxu0 0.0
    %194 = vmatpush2.msra.mxu0 0.0
    %195 = vmatprep.subr.mxu0 0.0
    %196 = vmatpush2.msra.mxu0 0.0
    %197 = vmatprep.mubr.f32.mxu0 0.0
    %198 = vmatmul.mubr.f32.gmra.mxu0 %v122
    %v199 = vpop.f32.mrf.mxu0
    %v200 = vadd.f32 0.0, %v199
    %v201 = vpop.f32.mrf.mxu0
    %202 = vmatprep.mubr.f32.mxu0 0.0
    %203 = vmatmul.mubr.f32.gmra.mxu0 %v125
    %v204 = vpop.f32.mrf.mxu0
    %v205 = vadd.f32 0.0, %v204
    %v206 = vpop.f32.mrf.mxu0
    %207 = vmatprep.mubr.f32.mxu0 0.0
    %208 = vmatmul.mubr.f32.gmra.mxu0 %v128
    %v209 = vpop.f32.mrf.mxu0
    %v210 = vadd.f32 0.0, %v209
    %v211 = vpop.f32.mrf.mxu0
    %212 = vmatprep.mubr.f32.mxu0 0.0
    %213 = vmatmul.mubr.f32.gmra.mxu0 %v131
    %v214 = vpop.f32.mrf.mxu0
    %v215 = vadd.f32 0.0, %v214
    %v216 = vpop.f32.mrf.mxu0
    %217 = vdwg.mxu0
    %v218 = vlaneseq
    %v219 = vshrl.u32 %v218, 7
    %v220 = vsub.s32 0, %v219
    %v221 = vrot.slane %v111, %v220
    %223 = vbcast.lane.b32.xlu0 %v221, 256
    %v224 = vpop.permute.xlu0 %223
    %s226 = sor.u32 256, 8
    %227 = vbcast.lane.b32.xlu0 %v221, %s226
    %v228 = vpop.permute.xlu0 %227
    %s230 = sor.u32 256, 16
    %231 = vbcast.lane.b32.xlu0 %v221, %s230
    %v232 = vpop.permute.xlu0 %231
    %s234 = sor.u32 256, 24
    %235 = vbcast.lane.b32.xlu0 %v221, %s234
    %v236 = vpop.permute.xlu0 %235
    %v237 = vlaneseq
    %v238 = vshrl.u32 %v237, 7
    %v239 = vsub.s32 1, %v238
    %v240 = vrot.slane %v111, %v239
    %242 = vbcast.lane.b32.xlu0 %v240, 256
    %v243 = vpop.permute.xlu0 %242
    %s245 = sor.u32 256, 8
    %246 = vbcast.lane.b32.xlu0 %v240, %s245
    %v247 = vpop.permute.xlu0 %246
    %s249 = sor.u32 256, 16
    %250 = vbcast.lane.b32.xlu0 %v240, %s249
    %v251 = vpop.permute.xlu0 %250
    %s253 = sor.u32 256, 24
    %254 = vbcast.lane.b32.xlu0 %v240, %s253
    %v255 = vpop.permute.xlu0 %254
    %v256 = vadd.f32 %v224, %v200
    %v257 = vadd.f32 %v228, %v205
    %v258 = vadd.f32 %v232, %v210
    %v259 = vadd.f32 %v236, %v215
    %v260 = vadd.f32 %v243, %v200
    %v261 = vadd.f32 %v247, %v205
    %v262 = vadd.f32 %v251, %v210
    %v263 = vadd.f32 %v255, %v215
    %v264 = vtanh.pop %v256
    %v265 = vtanh.pop %v257
    %v266 = vtanh.pop %v258
    %v267 = vtanh.pop %v259
    %v268 = vtanh.pop %v260
    %v269 = vtanh.pop %v261
    %v270 = vtanh.pop %v262
    %v271 = vtanh.pop %v263
    %v272 = vld [vmem:[%s5] sm:$0xff]
    %v273 = vld [vmem:[%s5 + $0x8] sm:$0xff]
    %v274 = vld [vmem:[%s5 + $0x10] sm:$0xff]
    %v275 = vld [vmem:[%s5 + $0x18] sm:$0xff]
    %277 = vset.pattern.permute.xlu0 0
    %278 = vperm.xlu0 %277, %v272
    %v279 = vpop.permute.xlu0 %278
    %282 = vset.pattern.permute.xlu0 0
    %283 = vperm.xlu0 %282, %v273
    %v284 = vpop.permute.xlu0 %283
    %287 = vset.pattern.permute.xlu0 0
    %288 = vperm.xlu0 %287, %v274
    %v289 = vpop.permute.xlu0 %288
    %292 = vset.pattern.permute.xlu0 0
    %293 = vperm.xlu0 %292, %v275
    %v294 = vpop.permute.xlu0 %293
    %v296 = vmul.f32 %v264, %v279
    %v297 = vmul.f32 %v265, %v284
    %v298 = vmul.f32 %v266, %v289
    %v299 = vmul.f32 %v267, %v294
    %v300 = vmul.f32 %v268, %v279
    %v301 = vmul.f32 %v269, %v284
    %v302 = vmul.f32 %v270, %v289
    %v303 = vmul.f32 %v271, %v294
    %v304 = vadd.f32 %v296, %v297
    %v305 = vadd.f32 %v304, %v298
    %v306 = vadd.f32 %v305, %v299
    %v307 = vrot.slane %v306, 4
    %v308 = vadd.f32 %v306, %v307
    %v309 = vrot.slane %v308, 2
    %v310 = vadd.f32 %v308, %v309
    %v311 = vrot.slane %v310, 1
    %v312 = vadd.f32 %v310, %v311
    %v313 = vadd.f32 %v300, %v301
    %v314 = vadd.f32 %v313, %v302
    %v315 = vadd.f32 %v314, %v303
    %v316 = vrot.slane %v315, 4
    %v317 = vadd.f32 %v315, %v316
    %v318 = vrot.slane %v317, 2
    %v319 = vadd.f32 %v317, %v318
    %v320 = vrot.slane %v319, 1
    %v321 = vadd.f32 %v319, %v320
    %v322 = vlaneseq
    %v323 = vand.u32 %v322, 127
    %vm324 = vcmp.lt.s32.totalorder %v323, 16
    %vm327 = vcmask 1041409
    %v328 = vsel %vm327, %v321, %v312
    %v330 = vsel %vm324, %v328, -inf
    %vm331 = vcmask 1041408
    %v332 = vsel %vm331, %v330, -inf
    %333 = vmax.xlane.f32.xlu0 %v332
    %v334 = vpop.xlane.xlu0 %333
    %v335 = vsub.f32 %v330, %v334
    %v336 = vmul.f32 %v335, 1.442695
    %v337 = vpow.pop %v336
    %v338 = vsel %vm331, %v337, 0.0
    %339 = vadd.xlane.f32.xlu0 %v338
    %v340 = vpop.xlane.xlu0 %339
    %v341 = vrcp.pop %v340
    %v342 = vmul.f32 %v337, %v341
    %343 = vst [vmem:[#allocation2] sm:$0x3] %v342
    // Predicated region
    $region26: #{tpu_custom_call.1} parent=1 // pred_check
      _
    $region27: #{tpu_custom_call.1} parent=1 // pred_check_branch
      %345 = sbr.rel (0) target = $region29
    $region28: #{tpu_custom_call.1} parent=1 // pred_region
      %s347 = ssub.s32 32, 32
      %348 = vsyncadd [#allocation3], %s347
      %s350 = sshll.u32 [#allocation2], 4
      %s351 = int_to_ptr.vmem [resolvable:$true] %s350
      %353 = dma.vmem_to_hbm [thread:$0]  %s351, 32, %s6, [#allocation3]
    $region29: #{tpu_custom_call.1} parent=1 // pred_fallthru
      _
    // Predicated region
    $region30: #{tpu_custom_call.1} parent=1 // pred_check
      _
    $region31: #{tpu_custom_call.1} parent=1 // pred_check_branch
      %355 = sbr.rel (0) target = $region33
    $region32: #{tpu_custom_call.1} parent=1 // pred_region
      %356 = dma.done [#allocation3], 32
    $region33: #{tpu_custom_call.1} parent=1 // pred_fallthru
      _
    %357 = vsyncpa [#allocation3], 1

</llo_original>
